<compile_context>
chip_gen: v7x
topology: tpu7x:2x2x1
jax: 0.10.0
libtpu: 0.0.40
codegen_flags: <defaults>
</compile_context>

<pallas_src>
import functools
import math

import jax
import jax.numpy as jnp
from jax.experimental import pallas as pl
from jax.experimental.pallas import tpu as pltpu


_LANES = 128                    # TPU vreg lane width
_SUBLANES = 8                   # f32 sublanes per vreg
_TARGET_BLOCK_BYTES = 4 << 20   # ~4 MiB x/out blocks; double-buffered x+out+pe < 48 MiB (v7x-safe)
_MIN_PALLAS_ELEMENTS = 1 << 15  # below this everything is one grid step; plain XLA wins


def build_pe(d_model: int, max_len: int = 500) -> jnp.ndarray:
    """Sinusoidal PE buffer, shape (1, max_len, d_model); matches the torch module."""
    position = jnp.arange(max_len, dtype=jnp.float32)[:, None]
    div_term = jnp.exp(jnp.arange(0, d_model, 2, dtype=jnp.float32)
                       * (-math.log(10000.0) / d_model))
    pe = jnp.zeros((max_len, d_model), dtype=jnp.float32)
    pe = pe.at[:, 0::2].set(jnp.sin(position * div_term))
    pe = pe.at[:, 1::2].set(jnp.cos(position * div_term))
    return pe[None, :, :]


def _mix_bits(idx, seed):
    """murmur3-fmix32 of (idx, seed). int32 in / int32 out, ~uniform over [-2^31, 2^31).
    Pure elementwise integer ops (mul/xor/shift) -> VPU only; identical results inside the
    kernel and in plain jnp, and the mask depends only on the global element index."""
    def lsr(v, n):  # logical shift right on int32 via arithmetic shift + mask
        return (v >> n) & jnp.int32((1 << (32 - n)) - 1)
    h = idx ^ (seed * jnp.int32(-1640531527))      # 0x9E3779B9
    h = h ^ lsr(h, 16)
    h = h * jnp.int32(-2048144789)                 # 0x85EBCA6B
    h = h ^ lsr(h, 13)
    h = h * jnp.int32(-1028477387)                 # 0xC2B2AE35
    h = h ^ lsr(h, 16)
    return h


def _dropout_thresh(p: float):
    # keep iff bits >= thresh  =>  P(keep) = 1 - p   (bits uniform over int32 range)
    t = int(round(p * 4294967296.0)) - 2147483648
    return jnp.int32(max(-(2 ** 31), min(t, 2 ** 31 - 1)))


# ---------------------------------------------------------------------------- kernel
def _pe_kernel(seed_ref, x_ref, pe_ref, o_ref, *, dropout_p, training, n_cols):
    # x_ref/o_ref: (Br, T).  pe_ref: (Br, T) (pre-tiled) or (1, T) (broadcast over rows).
    y = x_ref[...] + pe_ref[...]
    if training and dropout_p > 0.0:
        br, t = x_ref.shape
        cb = pl.program_id(0)                     # column-block axis (outer)
        rb = pl.program_id(1)                     # row-block axis (inner)
        rows = jax.lax.broadcasted_iota(jnp.int32, (br, t), 0) + rb * br
        cols = jax.lax.broadcasted_iota(jnp.int32, (br, t), 1) + cb * t
        idx = rows * jnp.int32(n_cols) + cols     # global flat index in (B, S, D)
        bits = _mix_bits(idx, seed_ref[0])
        inv_keep = jnp.asarray(1.0 / (1.0 - dropout_p), y.dtype)
        keep = bits >= _dropout_thresh(dropout_p)
        y = y * jnp.where(keep, inv_keep, jnp.asarray(0.0, y.dtype))
    o_ref[...] = y


# ------------------------------------------------------------------- tiling heuristics
def _choose_row_split(batch: int, flat_cols: int) -> int:
    """Factor G (divides S*D) folding each sequence into G rows so batch*G >= 8 rows."""
    if batch >= _SUBLANES:
        return 1
    for g in (1, 2, 4, 8):
        if flat_cols % g == 0 and batch * g >= _SUBLANES:
            return g
    for g in (8, 4, 2, 1):                        # fallback: best available divisor
        if flat_cols % g == 0:
            return g
    return 1


def _choose_tiles(rows: int, cols: int, itemsize: int):
    """Pick (Br, T): Br multiple of 8 (or == rows), T multiple of 128 (or == cols),
    x-block ~ _TARGET_BLOCK_BYTES, preferring long contiguous (lane-dense) DMA rows."""
    target = max(_SUBLANES * _LANES, _TARGET_BLOCK_BYTES // max(1, itemsize))
    if rows * cols <= target:
        return rows, cols
    if cols <= _LANES:
        t = cols
    else:
        t = (target // min(rows, _SUBLANES)) // _LANES * _LANES
        t = max(_LANES, min(t, (cols // _LANES) * _LANES))
    if rows <= _SUBLANES:
        br = rows
    else:
        br = (target // t) // _SUBLANES * _SUBLANES
        br = max(_SUBLANES, min(br, (rows // _SUBLANES) * _SUBLANES))
    return br, t


# ----------------------------------------------------------------------- pallas wrapper
def _forward_pallas(x2, pe2, br, t, *, dropout_p, training, seed):
    R, C = x2.shape
    grid = (pl.cdiv(C, t), pl.cdiv(R, br))        # rows innermost -> pe block stays resident
    kernel = functools.partial(_pe_kernel, dropout_p=float(dropout_p),
                               training=bool(training), n_cols=C)
    seed_arr = jnp.asarray([seed], dtype=jnp.int32)
    return pl.pallas_call(
        kernel,
        out_shape=jax.ShapeDtypeStruct((R, C), x2.dtype),
        grid_spec=pltpu.PrefetchScalarGridSpec(
            num_scalar_prefetch=1,
            grid=grid,
            in_specs=[
                pl.BlockSpec((br, t), lambda cb, rb, s: (rb, cb)),              # x
                pl.BlockSpec((pe2.shape[0], t), lambda cb, rb, s: (0, cb)),     # pe
            ],
            out_specs=pl.BlockSpec((br, t), lambda cb, rb, s: (rb, cb)),
        ),
        compiler_params=pltpu.CompilerParams(
            dimension_semantics=("parallel", "parallel"),
            vmem_limit_bytes=48 * 1024 * 1024,
        ),
    )(seed_arr, x2, pe2)


# --------------------------------------------------------------------------- reference
def reference_forward(x, pe, *, dropout_p, training, seed):
    """Plain-jnp forward using the *same* hash -> bit-compatible with the kernel.
    Also serves as the fast path for tiny problem sizes."""
    B, S, D = x.shape
    y = x + pe[:, :S, :].astype(x.dtype)
    if training and dropout_p > 0.0:
        if dropout_p >= 1.0:
            return jnp.zeros_like(x)
        idx = jnp.arange(B * S * D, dtype=jnp.int32).reshape(B, S, D)
        bits = _mix_bits(idx, jnp.int32(seed))
        inv_keep = jnp.asarray(1.0 / (1.0 - dropout_p), y.dtype)
        keep = bits >= _dropout_thresh(dropout_p)
        y = y * jnp.where(keep, inv_keep, jnp.asarray(0.0, y.dtype))
    return y


# ------------------------------------------------------------------------------ module
class PositionalEncoding:
    """Pallas-TPU equivalent of the PyTorch PositionalEncoding module."""

    def __init__(self, d_model: int, dropout: float = 0.1, max_len: int = 500):
        if not 0.0 <= dropout <= 1.0:
            raise ValueError(f"dropout must be in [0, 1], got {dropout}")
        self.d_model = d_model
        self.dropout_p = float(dropout)
        self.max_len = max_len
        self.pe = build_pe(d_model, max_len)      # (1, max_len, d_model) float32 buffer
        self._pe_flat_cache = {}                  # hoisted slice/cast/reshape/tile of pe

    def _pe_flat(self, seq, g, p_rows, dtype):
        key = (seq, g, p_rows, jnp.dtype(dtype).name)
        if key not in self._pe_flat_cache:
            chunk = self.pe[0, :seq, :].astype(dtype).reshape(g, -1)   # (G, S*D//G)
            if p_rows > g:                        # pre-tile so the kernel add is shape-equal
                chunk = jnp.tile(chunk, (p_rows // g, 1))
            self._pe_flat_cache[key] = chunk
        return self._pe_flat_cache[key]

    def __call__(self, x, *, training: bool = False, seed: int = 0, use_pallas=None):
        B, S, D = x.shape
        assert D == self.d_model and S <= self.max_len
        p = self.dropout_p
        if training and p >= 1.0:                 # nn.Dropout(p=1.0) semantics
            return jnp.zeros_like(x)
        if use_pallas is None:
            use_pallas = x.size >= _MIN_PALLAS_ELEMENTS
        if not use_pallas:
            return reference_forward(x, self.pe, dropout_p=p, training=training, seed=seed)

        G = _choose_row_split(B, S * D)           # sublane-dense row folding for small B
        R, C = B * G, (S * D) // G
        Br, T = _choose_tiles(R, C, jnp.dtype(x.dtype).itemsize)
        P = Br if G > 1 else 1                    # pe rows per block (Br is a multiple of G)
        pe2 = self._pe_flat(S, G, P, x.dtype)
        x2 = x.reshape(R, C)                      # lane- and sublane-dense 2-D view
        out2 = _forward_pallas(x2, pe2, Br, T, dropout_p=p, training=training, seed=seed)
        return out2.reshape(B, S, D)


# --------------------------------------------------------------------------------- test
if __name__ == "__main__":
    d_model, max_len = 32, 500
    batch, seq = 2, 8

    key = jax.random.PRNGKey(0)
    x = jax.random.normal(key, (batch, seq, d_model), dtype=jnp.float32)

    module = PositionalEncoding(d_model, dropout=0.1, max_len=max_len)

    # eval mode (dropout is identity); force the Pallas path even at this tiny size
    out_eval = jax.block_until_ready(module(x, training=False, use_pallas=True))
    ref_eval = reference_forward(x, module.pe, dropout_p=0.1, training=False, seed=0)
    assert out_eval.shape == (batch, seq, d_model)
    assert jnp.allclose(out_eval, ref_eval, atol=1e-6), "eval-mode mismatch vs reference"

    # training mode: fused inverted dropout with the tile-invariant counter-based mask
    p, seed = 0.1, 1234
    out_train = jax.block_until_ready(module(x, training=True, seed=seed, use_pallas=True))
    ref_train = reference_forward(x, module.pe, dropout_p=p, training=True, seed=seed)
    assert out_train.shape == (batch, seq, d_model)
    assert jnp.allclose(out_train, ref_train, atol=1e-6), "training-mode mismatch vs reference"

    kept = out_train != 0.0
    scaled_ref = ref_eval / (1.0 - p)
    assert jnp.allclose(jnp.where(kept, out_train, scaled_ref), scaled_ref, atol=1e-5), \
        "kept values are not (x + pe) / (1 - p)"
    dropped = int(jnp.sum(~kept))
    assert 0 < dropped < out_train.size // 2, f"implausible dropout count: {dropped}/{out_train.size}"

    print("KERNEL_OK")
</pallas_src>

<mosaic_0001>
module attributes {stable_mosaic.version = 11 : i64} {
  func.func @_pe_kernel(%arg0: i32, %arg1: i32, %arg2: memref<1xi32, #tpu.memory_space<smem>>, %arg3: memref<8x64xf32, #tpu.memory_space<vmem>>, %arg4: memref<8x64xf32, #tpu.memory_space<vmem>>, %arg5: memref<8x64xf32, #tpu.memory_space<vmem>>) attributes {dimension_semantics = [#tpu.dimension_semantics<parallel>, #tpu.dimension_semantics<parallel>], iteration_bounds = array<i64: 1, 1>, scalar_prefetch = 1 : i64, scratch_operands = 0 : i64, tpu.core_type = #tpu.core_type<tc>, window_params = [{transform_indices = @transform_0, window_bounds = array<i64: 8, 64>}, {transform_indices = @transform_1, window_bounds = array<i64: 8, 64>}, {transform_indices = @transform_2, window_bounds = array<i64: 8, 64>}]} {
    %c0 = arith.constant 0 : index
    %c0_0 = arith.constant 0 : index
    %0 = vector.load %arg3[%c0, %c0_0] : memref<8x64xf32, #tpu.memory_space<vmem>>, vector<8x64xf32>
    %c0_1 = arith.constant 0 : index
    %c0_2 = arith.constant 0 : index
    %1 = vector.load %arg4[%c0_1, %c0_2] : memref<8x64xf32, #tpu.memory_space<vmem>>, vector<8x64xf32>
    %2 = arith.addf %0, %1 : vector<8x64xf32>
    %c0_3 = arith.constant 0 : index
    %c0_4 = arith.constant 0 : index
    %3 = vector.load %arg5[%c0_3, %c0_4] : memref<8x64xf32, #tpu.memory_space<vmem>>, vector<8x64xf32>
    tpu.vector_store %arg5[%c0_3, %c0_4], %2 {strides = array<i32>} : memref<8x64xf32, #tpu.memory_space<vmem>>, vector<8x64xf32>,
    return
  }
  func.func @transform_0(%arg0: i32, %arg1: i32, %arg2: memref<1xi32, #tpu.memory_space<smem>>) -> (i32, i32) {
    %c0_i32 = arith.constant 0 : i32
    return %arg1, %arg0 : i32, i32
  }
  func.func @transform_1(%arg0: i32, %arg1: i32, %arg2: memref<1xi32, #tpu.memory_space<smem>>) -> (i32, i32) {
    %c0_i32 = arith.constant 0 : i32
    %c0_i32_0 = arith.constant 0 : i32
    return %c0_i32, %arg0 : i32, i32
  }
  func.func @transform_2(%arg0: i32, %arg1: i32, %arg2: memref<1xi32, #tpu.memory_space<smem>>) -> (i32, i32) {
    %c0_i32 = arith.constant 0 : i32
    return %arg1, %arg0 : i32, i32
  }
}

</mosaic_0001>

<llo_original>
// kernel: tpu_custom_call.1
$region0: #{tpu_custom_call.1}
  #allocation0 [shape = 'u32[]', space=smem, size = 0x4, offset = 0x4, fixed_abs, tag = 'smem constant byte address 0x4 - core index']
  #allocation1 [shape = 'u32[144,128]{1,0:T(1,128)}', space=vmem, size = 0x12000, scoped, tag = 'internal scratch']
  #allocation2 [shape = 's32[1]{0}', space=sflag, size = 0x4, scoped, tag = 'scoped memory for tpu_custom_call.1']
  #allocation3 [shape = 's32[1]{0:T(128)S(6)}', space=smem, size = 0x200, scoped, tag = 'prefetched SMEM operand 0']
  %s0 = inlined_call_operand.<no memory space> [shape: s32[1], index: 0, kind: input, shape index: {}]
  %s1 = inlined_call_operand.hbm [shape: f32[8,64], index: 1, kind: input, shape index: {}]
  %s2 = inlined_call_operand.hbm [shape: f32[8,64], index: 2, kind: input, shape index: {}]
  %s3 = inlined_call_operand.hbm [shape: f32[8,64], index: 3, kind: output, shape index: {}]
  %s4 = sld [smem:[#allocation0]]
  $region26: #{tpu_custom_call.1} parent=0
    _
  %s6 = ssub.s32 1, %s4
  %s7 = scalar_select 0, %s6, %s4
  %8 = sst [smem:[#allocation3]] %s0
  $region1: #{tpu_custom_call.1} parent=0
    #allocation4 [shape = 'u8[4096]{0}', space=vmem, size = 0x1000, scoped, tag = 'input window, operand 1, single buffered']
    #allocation5 [shape = 's32[1]{0}', space=sflag, size = 0x4, scoped, tag = 'scoped memory for tpu_custom_call.1']
    #allocation6 [shape = 's32[1]{0}', space=sflag, size = 0x4, scoped, tag = 'scoped memory for tpu_custom_call.1']
    #allocation7 [shape = 'u8[4096]{0}', space=vmem, size = 0x1000, scoped, tag = 'input window, operand 2, single buffered']
    #allocation8 [shape = 's32[1]{0}', space=sflag, size = 0x4, scoped, tag = 'scoped memory for tpu_custom_call.1']
    #allocation9 [shape = 'u8[4096]{0}', space=vmem, size = 0x1000, scoped, tag = 'output window, operand 0, single buffered']
    %9 = vsyncpa [#allocation5], 0
    %10 = vsyncpa [#allocation8], 0
    %11 = vsyncpa [#allocation6], 0
    // Predicated region
    $region2: #{tpu_custom_call.1} parent=1 // pred_check
      _
    $region3: #{tpu_custom_call.1} parent=1 // pred_check_branch
      %13 = sbr.rel (0) target = $region5
    $region4: #{tpu_custom_call.1} parent=1 // pred_region
      %s15 = ssub.s32 128, 128
      %16 = vsyncadd [#allocation5], %s15
      %s18 = sshll.u32 [#allocation4], 4
      %s19 = int_to_ptr.vmem [resolvable:$true] %s18
      %21 = dma.hbm_to_vmem [thread:$0]  %s1, 128, %s19, [#allocation5]
    $region5: #{tpu_custom_call.1} parent=1 // pred_fallthru
      _
    // Predicated region
    $region6: #{tpu_custom_call.1} parent=1 // pred_check
      _
    $region7: #{tpu_custom_call.1} parent=1 // pred_check_branch
      %23 = sbr.rel (0) target = $region9
    $region8: #{tpu_custom_call.1} parent=1 // pred_region
      %s25 = ssub.s32 128, 128
      %26 = vsyncadd [#allocation8], %s25
      %s28 = sshll.u32 [#allocation7], 4
      %s29 = int_to_ptr.vmem [resolvable:$true] %s28
      %31 = dma.hbm_to_vmem [thread:$0]  %s2, 128, %s29, [#allocation8]
    $region9: #{tpu_custom_call.1} parent=1 // pred_fallthru
      _
    // Predicated region
    $region10: #{tpu_custom_call.1} parent=1 // pred_check
      _
    $region11: #{tpu_custom_call.1} parent=1 // pred_check_branch
      %33 = sbr.rel (0) target = $region13
    $region12: #{tpu_custom_call.1} parent=1 // pred_region
      %34 = dma.done [#allocation5], 128
    $region13: #{tpu_custom_call.1} parent=1 // pred_fallthru
      _
    // Predicated region
    $region14: #{tpu_custom_call.1} parent=1 // pred_check
      _
    $region15: #{tpu_custom_call.1} parent=1 // pred_check_branch
      %36 = sbr.rel (0) target = $region17
    $region16: #{tpu_custom_call.1} parent=1 // pred_region
      %37 = dma.done [#allocation8], 128
    $region17: #{tpu_custom_call.1} parent=1 // pred_fallthru
      _
    %v38 = vld [vmem:[#allocation4] sm:$0xff]
    %v39 = vld [vmem:[#allocation7] sm:$0xff]
    %v40 = vadd.f32 %v38, %v39
    %vm41 = vcmask 523264
    %42 = vst.msk [vmem:[#allocation9] sm:$0xff] %vm41, %v40
    // Predicated region
    $region18: #{tpu_custom_call.1} parent=1 // pred_check
      _
    $region19: #{tpu_custom_call.1} parent=1 // pred_check_branch
      %44 = sbr.rel (0) target = $region21
    $region20: #{tpu_custom_call.1} parent=1 // pred_region
      %s46 = ssub.s32 128, 128
      %47 = vsyncadd [#allocation6], %s46
      %s49 = sshll.u32 [#allocation9], 4
      %s50 = int_to_ptr.vmem [resolvable:$true] %s49
      %52 = dma.vmem_to_hbm [thread:$0]  %s50, 128, %s3, [#allocation6]
    $region21: #{tpu_custom_call.1} parent=1 // pred_fallthru
      _
    // Predicated region
    $region22: #{tpu_custom_call.1} parent=1 // pred_check
      _
    $region23: #{tpu_custom_call.1} parent=1 // pred_check_branch
      %54 = sbr.rel (0) target = $region25
    $region24: #{tpu_custom_call.1} parent=1 // pred_region
      %55 = dma.done [#allocation6], 128
    $region25: #{tpu_custom_call.1} parent=1 // pred_fallthru
      _
    %56 = vsyncpa [#allocation5], 1
    %57 = vsyncpa [#allocation8], 1
    %58 = vsyncpa [#allocation6], 1

</llo_original>
